<compile_context>
chip_gen: v7x
topology: tpu7x:2x2x1
jax: 0.10.0
libtpu: 0.0.40
codegen_flags: <defaults>
</compile_context>

<pallas_src>
import math
import jax
import jax.numpy as jnp
from jax.experimental import pallas as pl
from jax.experimental.pallas import tpu as pltpu


def make_positional_encoding_table(d_model: int = 384, max_len: int = 5000,
                                   dtype=jnp.float32) -> jnp.ndarray:
    """Deterministic sinusoidal PE table, identical to the PyTorch __init__."""
    position = jnp.arange(0, max_len, dtype=jnp.float32)[:, None]          # (max_len, 1)
    div_term = jnp.exp(jnp.arange(0, d_model, 2, dtype=jnp.float32)
                       * (-math.log(10000.0) / d_model))                   # (d_model//2,)
    pe = jnp.zeros((max_len, d_model), dtype=jnp.float32)
    pe = pe.at[:, 0::2].set(jnp.sin(position * div_term))
    pe = pe.at[:, 1::2].set(jnp.cos(position * div_term))
    return pe.astype(dtype)                                                # (max_len, d_model)


def _pe_add_kernel(x_ref, pe_ref, o_ref):
    # x_ref / o_ref: (B, TS, D); pe_ref: (TS, D) in the table dtype (usually fp32).
    # In-kernel cast (free: DMA-bound kernel, VPU slot has slack) + broadcast over batch.
    o_ref[...] = x_ref[...] + pe_ref[...].astype(o_ref.dtype)[None, :, :]


def _sublane_quantum(itemsize: int) -> int:
    # Packed sublane quantum: 8 rows for 4-byte, 16 for 2-byte, 32 for 1-byte dtypes.
    return {4: 8, 2: 16, 1: 32}.get(itemsize, 8)


def _vmem_budget_bytes() -> int:
    """Generation-aware VMEM budget for the double-buffered x/out/pe blocks."""
    cap = 64 * 1024 * 1024  # conservative default (v7x physical VMEM)
    try:
        cap = int(pltpu.get_tpu_info().vmem_capacity_bytes)
    except Exception:
        pass
    # ~1/3 of physical VMEM, clamped: ≈40 MiB on v5e/v6e (128 MiB), ≈21 MiB on v7x (64 MiB).
    return int(min(max(cap // 3, 12 * 1024 * 1024), 40 * 1024 * 1024))


def _pick_seq_tile(batch: int, seq_len: int, d_model: int,
                   x_itemsize: int, pe_itemsize: int,
                   quantum: int, budget_bytes: int) -> int:
    """Largest seq tile (dtype-aware sublane multiple, capped at 4096) whose
    double-buffered x/out/pe footprint fits the per-generation VMEM budget."""
    per_row = 2 * (2 * batch * x_itemsize + pe_itemsize) * d_model  # 2× double-buffering
    ts = max(budget_bytes // max(per_row, 1), quantum)
    ts = min(ts, 4096)
    if ts >= seq_len:
        # Whole sequence fits in one block.  For large sequences still split into
        # >=2 tiles so both v7x TensorCores get parallel grid work.
        if seq_len >= 1024:
            half = pl.cdiv(seq_len, 2)
            ts2 = pl.cdiv(half, quantum) * quantum
            if ts2 < seq_len:
                return ts2
        return seq_len
    return max(quantum, (ts // quantum) * quantum)


def positional_encoding_forward(x: jnp.ndarray, pe_table: jnp.ndarray,
                                seq_tile: int | None = None,
                                donate_x: bool = False) -> jnp.ndarray:
    """x: (b, seq_len, d_model); pe_table: (max_len, d_model). Returns x + pe[:seq_len]."""
    b, seq_len, d_model = x.shape
    max_len, pe_d = pe_table.shape
    assert pe_d == d_model, "pe_table feature dim must match x"
    assert seq_len <= max_len, "seq_len exceeds PE table max_len"

    x_itemsize = x.dtype.itemsize
    pe_itemsize = pe_table.dtype.itemsize
    quantum = _sublane_quantum(x_itemsize)
    budget = _vmem_budget_bytes()

    if seq_tile is None:
        ts = _pick_seq_tile(b, seq_len, d_model, x_itemsize, pe_itemsize, quantum, budget)
    else:
        # Defensive rounding of user-supplied tiles (multiple of the sublane quantum
        # or the full sequence) so the BlockSpec always lowers.
        ts = int(seq_tile)
        if ts >= seq_len:
            ts = seq_len
        else:
            ts = max(quantum, (ts // quantum) * quantum)
            if ts >= seq_len:
                ts = seq_len

    n_seq_tiles = pl.cdiv(seq_len, ts)

    # Guard: the PE window is taken from the full (max_len, D) table via the
    # BlockSpec index_map; keep the last block in-bounds of the table.
    if n_seq_tiles * ts > max_len:
        ts = seq_len
        n_seq_tiles = 1

    # BlockSpec legality on the PE table: the seq block dim must be a multiple of 8
    # or equal the full (table) array dim.  Only the tiny odd-length single-block
    # case can violate this; slice the table once so the block equals the array.
    if ts % 8 != 0 and ts != max_len:
        pe_in = pe_table[:ts]
    else:
        pe_in = pe_table

    cost = pl.CostEstimate(
        flops=b * seq_len * d_model,
        transcendentals=0,
        bytes_accessed=(2 * b * seq_len * d_model * x_itemsize
                        + seq_len * d_model * pe_itemsize),
    )
    vmem_limit = int(min(budget * 3 // 2, 48 * 1024 * 1024))

    return pl.pallas_call(
        _pe_add_kernel,
        out_shape=jax.ShapeDtypeStruct((b, seq_len, d_model), x.dtype),
        grid_spec=pltpu.PrefetchScalarGridSpec(
            num_scalar_prefetch=0,
            grid=(n_seq_tiles,),
            in_specs=[
                pl.BlockSpec((b, ts, d_model), lambda j: (0, j, 0)),   # x: batch folded in
                pl.BlockSpec((ts, d_model), lambda j: (j, 0)),         # pe: windowed full table
            ],
            out_specs=pl.BlockSpec((b, ts, d_model), lambda j: (0, j, 0)),
        ),
        compiler_params=pltpu.CompilerParams(
            dimension_semantics=("parallel",),
            vmem_limit_bytes=vmem_limit,
        ),
        cost_estimate=cost,
        input_output_aliases=({0: 0} if donate_x else {}),
    )(x, pe_in)


if __name__ == "__main__":
    key = jax.random.PRNGKey(0)

    # --- Test 1: small shapes consistent with the module's forward (single-block path) ---
    B, S, D = 2, 8, 32
    MAX_LEN = 64
    x = jax.random.normal(key, (B, S, D), dtype=jnp.float32)
    pe_table = make_positional_encoding_table(d_model=D, max_len=MAX_LEN)

    out = positional_encoding_forward(x, pe_table)
    out = jax.block_until_ready(out)
    ref = x + pe_table[None, :S, :]
    assert out.shape == (B, S, D)
    assert jnp.allclose(out, ref, atol=1e-6), "mismatch vs reference (test 1)"

    # --- Test 2: tiled multi-step grid with a partial last block (PE windowed from table) ---
    B2, S2, D2 = 2, 40, 128
    key2 = jax.random.fold_in(key, 1)
    x2 = jax.random.normal(key2, (B2, S2, D2), dtype=jnp.float32)
    pe_table2 = make_positional_encoding_table(d_model=D2, max_len=64)

    out2 = positional_encoding_forward(x2, pe_table2, seq_tile=16)
    out2 = jax.block_until_ready(out2)
    ref2 = x2 + pe_table2[None, :S2, :]
    assert out2.shape == (B2, S2, D2)
    assert jnp.allclose(out2, ref2, atol=1e-6), "mismatch vs reference (test 2)"

    # --- Test 3: bf16 activations, module-default d_model, odd user tile (rounded to 16),
    #             in-kernel fp32->bf16 cast, and aliased (donated) output buffer ---
    B3, S3, D3 = 2, 24, 384
    key3 = jax.random.fold_in(key, 2)
    x3 = jax.random.normal(key3, (B3, S3, D3), dtype=jnp.float32).astype(jnp.bfloat16)
    pe_table3 = make_positional_encoding_table(d_model=D3, max_len=128)
    ref3 = x3 + pe_table3[None, :S3, :].astype(jnp.bfloat16)   # computed before the donated call

    out3 = positional_encoding_forward(x3, pe_table3, seq_tile=12, donate_x=True)
    out3 = jax.block_until_ready(out3)
    assert out3.shape == (B3, S3, D3) and out3.dtype == jnp.bfloat16
    assert jnp.allclose(out3.astype(jnp.float32), ref3.astype(jnp.float32),
                        atol=1e-2), "mismatch vs reference (test 3)"

    print("KERNEL_OK")
</pallas_src>

<mosaic_0001>
module attributes {stable_mosaic.version = 11 : i64} {
  func.func @_pe_add_kernel(%arg0: i32, %arg1: memref<2x8x32xf32, #tpu.memory_space<vmem>>, %arg2: memref<8x32xf32, #tpu.memory_space<vmem>>, %arg3: memref<2x8x32xf32, #tpu.memory_space<vmem>>) attributes {dimension_semantics = [#tpu.dimension_semantics<parallel>], iteration_bounds = array<i64: 1>, scalar_prefetch = 0 : i64, scratch_operands = 0 : i64, tpu.core_type = #tpu.core_type<tc>, window_params = [{transform_indices = @transform_0, window_bounds = array<i64: 2, 8, 32>}, {transform_indices = @transform_1, window_bounds = array<i64: 8, 32>}, {transform_indices = @transform_2, window_bounds = array<i64: 2, 8, 32>}]} {
    %c0 = arith.constant 0 : index
    %c0_0 = arith.constant 0 : index
    %c0_1 = arith.constant 0 : index
    %0 = vector.load %arg1[%c0, %c0_0, %c0_1] : memref<2x8x32xf32, #tpu.memory_space<vmem>>, vector<2x8x32xf32>
    %c0_2 = arith.constant 0 : index
    %c0_3 = arith.constant 0 : index
    %1 = vector.load %arg2[%c0_2, %c0_3] : memref<8x32xf32, #tpu.memory_space<vmem>>, vector<8x32xf32>
    %2 = vector.shape_cast %1 : vector<8x32xf32> to vector<1x8x32xf32>
    %3 = vector.broadcast %2 : vector<1x8x32xf32> to vector<2x8x32xf32>
    %4 = arith.addf %0, %3 : vector<2x8x32xf32>
    %c0_4 = arith.constant 0 : index
    %c0_5 = arith.constant 0 : index
    %c0_6 = arith.constant 0 : index
    %5 = vector.load %arg3[%c0_4, %c0_5, %c0_6] : memref<2x8x32xf32, #tpu.memory_space<vmem>>, vector<2x8x32xf32>
    tpu.vector_store %arg3[%c0_4, %c0_5, %c0_6], %4 {strides = array<i32>} : memref<2x8x32xf32, #tpu.memory_space<vmem>>, vector<2x8x32xf32>,
    return
  }
  func.func @transform_0(%arg0: i32) -> (i32, i32, i32) {
    %c0_i32 = arith.constant 0 : i32
    %c0_i32_0 = arith.constant 0 : i32
    %c0_i32_1 = arith.constant 0 : i32
    return %c0_i32, %arg0, %c0_i32_0 : i32, i32, i32
  }
  func.func @transform_1(%arg0: i32) -> (i32, i32) {
    %c0_i32 = arith.constant 0 : i32
    %c0_i32_0 = arith.constant 0 : i32
    return %arg0, %c0_i32 : i32, i32
  }
  func.func @transform_2(%arg0: i32) -> (i32, i32, i32) {
    %c0_i32 = arith.constant 0 : i32
    %c0_i32_0 = arith.constant 0 : i32
    %c0_i32_1 = arith.constant 0 : i32
    return %c0_i32, %arg0, %c0_i32_0 : i32, i32, i32
  }
}

</mosaic_0001>

<llo_original>
// kernel: tpu_custom_call.1
$region0: #{tpu_custom_call.1}
  #allocation0 [shape = 'u32[]', space=smem, size = 0x4, offset = 0x4, fixed_abs, tag = 'smem constant byte address 0x4 - core index']
  #allocation1 [shape = 'u32[144,128]{1,0:T(1,128)}', space=vmem, size = 0x12000, scoped, tag = 'internal scratch']
  %s0 = inlined_call_operand.vmem [shape: f32[2,8,32], index: 0, kind: input, shape index: {}]
  %s1 = inlined_call_operand.vmem [shape: f32[64,32], index: 1, kind: input, shape index: {}]
  %s2 = inlined_call_operand.hbm [shape: f32[2,8,32], index: 2, kind: output, shape index: {}]
  %s3 = sld [smem:[#allocation0]]
  $region18: #{tpu_custom_call.1} parent=0
    _
  %s5 = ssub.s32 1, %s3
  %s6 = scalar_select 0, %s5, %s3
  $region1: #{tpu_custom_call.1} parent=0
    #allocation2 [shape = 'u8[8192]{0}', space=vmem, size = 0x2000, scoped, tag = 'output window, operand 0, single buffered']
    #allocation3 [shape = 's32[1]{0}', space=sflag, size = 0x4, scoped, tag = 'scoped memory for tpu_custom_call.1']
    %7 = vsyncpa [#allocation3], 0
    // Predicated region
    $region2: #{tpu_custom_call.1} parent=1 // pred_check
      _
    $region3: #{tpu_custom_call.1} parent=1 // pred_check_branch
      %9 = sbr.rel (0) target = $region5
    $region4: #{tpu_custom_call.1} parent=1 // pred_region
      _
    $region5: #{tpu_custom_call.1} parent=1 // pred_fallthru
      _
    // Predicated region
    $region6: #{tpu_custom_call.1} parent=1 // pred_check
      _
    $region7: #{tpu_custom_call.1} parent=1 // pred_check_branch
      %11 = sbr.rel (0) target = $region9
    $region8: #{tpu_custom_call.1} parent=1 // pred_region
      _
    $region9: #{tpu_custom_call.1} parent=1 // pred_fallthru
      _
    %v12 = vld [vmem:[%s0] sm:$0xff]
    %v13 = vld [vmem:[%s0 + $0x8] sm:$0xff]
    %v14 = vld [vmem:[%s1] sm:$0xff]
    %v15 = vadd.f32 %v12, %v14
    %v16 = vadd.f32 %v13, %v14
    %vm17 = vcmask 261120
    %18 = vst.msk [vmem:[#allocation2] sm:$0xff] %vm17, %v15
    %19 = vst.msk [vmem:[#allocation2 + $0x8] sm:$0xff] %vm17, %v16
    // Predicated region
    $region10: #{tpu_custom_call.1} parent=1 // pred_check
      _
    $region11: #{tpu_custom_call.1} parent=1 // pred_check_branch
      %21 = sbr.rel (0) target = $region13
    $region12: #{tpu_custom_call.1} parent=1 // pred_region
      %s23 = ssub.s32 256, 256
      %24 = vsyncadd [#allocation3], %s23
      %s25 = sshll.u32 [#allocation2], 4
      %s26 = int_to_ptr.vmem [resolvable:$true] %s25
      %31 = dma.vmem_to_hbm [thread:$0]  %s26, 256, %s2, [#allocation3], 128, 128, 8
    $region13: #{tpu_custom_call.1} parent=1 // pred_fallthru
      _
    // Predicated region
    $region14: #{tpu_custom_call.1} parent=1 // pred_check
      _
    $region15: #{tpu_custom_call.1} parent=1 // pred_check_branch
      %33 = sbr.rel (0) target = $region17
    $region16: #{tpu_custom_call.1} parent=1 // pred_region
      %34 = dma.done [#allocation3], 256
    $region17: #{tpu_custom_call.1} parent=1 // pred_fallthru
      _
    %35 = vsyncpa [#allocation3], 1

</llo_original>
